<compile_context>
chip_gen: v5e
topology: v5e:2x2
jax: 0.10.0
libtpu: 0.0.40
codegen_flags: <defaults>
</compile_context>

<pallas_src>
import functools

import jax
import jax.numpy as jnp
from jax.experimental import pallas as pl
from jax.experimental.pallas import tpu as pltpu


def _round_up(n: int, m: int) -> int:
    return ((n + m - 1) // m) * m


def _iou_loss_kernel(pred_ref, true_ref, out_ref, *, x_var, w_var):
    """Elementwise IoU-style loss on component planes.

    pred_ref / true_ref : (4, bm, 128) f32 tiles, order [x, y, log-w, log-h].
    out_ref             : (8, bm, 128) f32 tile, rows 0-3 loss, rows 4-7 grad.
    """
    x_n, y_n, w_ln, h_ln = pred_ref[0], pred_ref[1], pred_ref[2], pred_ref[3]
    xt_n, yt_n, wt_ln, ht_ln = true_ref[0], true_ref[1], true_ref[2], true_ref[3]

    # ---- center terms (iou_loss_x for x and y) -----------------------------
    log_wt = wt_ln * w_var            # == log(exp(wt_ln * w_var)); reuse, no 2nd log
    log_ht = ht_ln * w_var
    wt = jnp.exp(log_wt)              # one exp per side, shared by loss and grad
    ht = jnp.exp(log_ht)

    dx = jnp.abs(x_n - xt_n) * x_var
    dy = jnp.abs(y_n - yt_n) * x_var
    w_plus_dx = wt + dx
    h_plus_dy = ht + dy

    # loss = wt*log(wt+dx) - wt*log(wt); grad = wt / (wt+dx)
    out_ref[0] = wt * (jnp.log(w_plus_dx) - log_wt)
    out_ref[1] = ht * (jnp.log(h_plus_dy) - log_ht)
    out_ref[4] = wt / w_plus_dx
    out_ref[5] = ht / h_plus_dy

    # ---- size terms (iou_loss_w for w and h) --------------------------------
    dlw = jnp.abs(w_ln - wt_ln) * w_var
    dlh = jnp.abs(h_ln - ht_ln) * w_var
    iou_w = jnp.exp(-dlw)             # one exp, shared by loss and grad
    iou_h = jnp.exp(-dlh)
    inv_w_var = 1.0 / w_var           # Python scalar, folded at trace time

    out_ref[2] = (dlw + iou_w - 1.0) * inv_w_var
    out_ref[3] = (dlh + iou_h - 1.0) * inv_w_var
    out_ref[6] = 1.0 - iou_w
    out_ref[7] = 1.0 - iou_h


def iou_loss_planes_pallas(pred_planes, true_planes, x_var, w_var, *,
                           block_m: int = 1024):
    """Component-major entry point (no host relayout).

    pred_planes / true_planes: (4, M, 128) f32, M a multiple of 8.
    Returns (8, M, 128) f32: rows 0-3 loss, rows 4-7 grad.
    """
    assert pred_planes.shape == true_planes.shape
    _, M, lanes = pred_planes.shape
    assert lanes == 128 and M % 8 == 0

    # Tile rows: cap by block_m, and when one block would swallow the whole
    # problem, split in two so the "parallel" grid axis can shard across the
    # two TensorCores on v7x (no-op on v5e/v6e).
    bm = max(8, min(block_m, M))
    if bm >= M and M > 8:
        bm = _round_up(-(-M // 2), 8)
    grid_m = pl.cdiv(M, bm)           # ragged last block handled by Pallas

    kernel = functools.partial(_iou_loss_kernel,
                               x_var=float(x_var), w_var=float(w_var))

    in_spec = pl.BlockSpec((4, bm, 128), lambda i: (0, i, 0))
    out_spec = pl.BlockSpec((8, bm, 128), lambda i: (0, i, 0))

    n_elems = M * 128
    return pl.pallas_call(
        kernel,
        out_shape=jax.ShapeDtypeStruct((8, M, 128), jnp.float32),
        grid=(grid_m,),
        in_specs=[in_spec, in_spec],
        out_specs=out_spec,
        compiler_params=pltpu.CompilerParams(
            dimension_semantics=("parallel",),
            # Explicit 32 MiB: above v5e's 16 MiB scoped default, within v7x's
            # 32 MiB default / 64 MiB physical; bm=1024 double-buffers at 16 MiB.
            vmem_limit_bytes=32 * 1024 * 1024,
        ),
        cost_estimate=pl.CostEstimate(
            flops=40 * n_elems,
            transcendentals=6 * n_elems,
            bytes_accessed=64 * n_elems,
        ),
    )(pred_planes, true_planes)


def iou_loss_pallas(pred, true, x_var, w_var, *, block_m: int = 1024):
    """(N, 4) compatibility wrapper matching the PyTorch IoU_Loss.forward.

    Returns (loss, grad), each (4*N,), ordered as torch.cat([xl, yl, wl, hl]).
    Note: the (N,4)->planes transpose and the final slice are extra HBM passes;
    production callers should use iou_loss_planes_pallas end-to-end.
    """
    N = pred.shape[0]
    assert pred.shape == (N, 4) and true.shape == (N, 4)

    M = _round_up(max(-(-N // 128), 1), 8)   # 128-lane rows, padded to 8 only
    n_pad = M * 128

    def to_planes(a):
        a = jnp.asarray(a, jnp.float32)
        a = jnp.pad(a, ((0, n_pad - N), (0, 0)))   # zero pad: numerically safe
        return a.T.reshape(4, M, 128)

    out = iou_loss_planes_pallas(to_planes(pred), to_planes(true),
                                 x_var, w_var, block_m=block_m)

    out_flat = out.reshape(8, n_pad)[:, :N]
    loss = out_flat[:4].reshape(-1)
    grad = out_flat[4:].reshape(-1)
    return loss, grad


def iou_loss_reference(pred, true, x_var, w_var):
    """Pure-JAX mirror of the PyTorch IoU_Loss.forward (for verification)."""
    pred = jnp.asarray(pred, jnp.float32)
    true = jnp.asarray(true, jnp.float32)
    x_n, y_n, w_ln, h_ln = [pred[:, i:i + 1] for i in range(4)]
    xt_n, yt_n, wt_ln, ht_ln = [true[:, i:i + 1] for i in range(4)]

    def loss_x(x, xt, wtl):
        delta = jnp.abs(x - xt) * x_var
        wt = jnp.exp(wtl * w_var)
        wpd = wt + delta
        return wt * jnp.log(wpd) - wt * jnp.log(wt), wt / wpd

    def loss_w(wl, wtl):
        dl = jnp.abs(wl - wtl) * w_var
        iou = jnp.exp(-dl)
        return (dl + iou - 1.0) / w_var, 1.0 - iou

    xl, xg = loss_x(x_n, xt_n, wt_ln)
    yl, yg = loss_x(y_n, yt_n, ht_ln)
    wl_, wg = loss_w(w_ln, wt_ln)
    hl, hg = loss_w(h_ln, ht_ln)
    loss = jnp.concatenate([xl, yl, wl_, hl], axis=0).reshape(-1)
    grad = jnp.concatenate([xg, yg, wg, hg], axis=0).reshape(-1)
    return loss, grad


def _check(N, block_m, key):
    kp, kt = jax.random.split(key)
    x_var, w_var = 0.5, 0.8
    pred = jax.random.normal(kp, (N, 4), dtype=jnp.float32)
    true = jax.random.normal(kt, (N, 4), dtype=jnp.float32)

    loss, grad = iou_loss_pallas(pred, true, x_var, w_var, block_m=block_m)
    loss, grad = jax.block_until_ready((loss, grad))

    loss_ref, grad_ref = iou_loss_reference(pred, true, x_var, w_var)
    assert loss.shape == (4 * N,) and grad.shape == (4 * N,)
    assert bool(jnp.allclose(loss, loss_ref, rtol=1e-4, atol=1e-5)), "loss mismatch"
    assert bool(jnp.allclose(grad, grad_ref, rtol=1e-4, atol=1e-5)), "grad mismatch"


if __name__ == "__main__":
    key = jax.random.PRNGKey(0)
    k1, k2 = jax.random.split(key)

    # Case 1: tiny, not a multiple of 128 -> single (4, 8, 128) block.
    _check(N=200, block_m=8, key=k1)
    # Case 2: multi-block grid with a ragged last block:
    #   N=2949 -> M=24 rows, bm=16 -> grid = cdiv(24,16) = 2, last block partial.
    _check(N=2949, block_m=16, key=k2)

    print("KERNEL_OK")
</pallas_src>

<mosaic_0001>
module attributes {stable_mosaic.version = 11 : i64} {
  func.func @_iou_loss_kernel(%arg0: i32, %arg1: memref<4x8x128xf32, #tpu.memory_space<vmem>>, %arg2: memref<4x8x128xf32, #tpu.memory_space<vmem>>, %arg3: memref<8x8x128xf32, #tpu.memory_space<vmem>>) attributes {dimension_semantics = [#tpu.dimension_semantics<parallel>], iteration_bounds = array<i64: 1>, scalar_prefetch = 0 : i64, scratch_operands = 0 : i64, tpu.core_type = #tpu.core_type<tc>, window_params = [{transform_indices = @transform_0, window_bounds = array<i64: 4, 8, 128>}, {transform_indices = @transform_1, window_bounds = array<i64: 4, 8, 128>}, {transform_indices = @transform_2, window_bounds = array<i64: 8, 8, 128>}]} {
    %c0 = arith.constant 0 : index
    %c0_0 = arith.constant 0 : index
    %c0_1 = arith.constant 0 : index
    %0 = vector.load %arg1[%c0, %c0_0, %c0_1] : memref<4x8x128xf32, #tpu.memory_space<vmem>>, vector<1x8x128xf32>
    %1 = vector.shape_cast %0 : vector<1x8x128xf32> to vector<8x128xf32>
    %c1 = arith.constant 1 : index
    %c0_2 = arith.constant 0 : index
    %c0_3 = arith.constant 0 : index
    %2 = vector.load %arg1[%c1, %c0_2, %c0_3] : memref<4x8x128xf32, #tpu.memory_space<vmem>>, vector<1x8x128xf32>
    %3 = vector.shape_cast %2 : vector<1x8x128xf32> to vector<8x128xf32>
    %c2 = arith.constant 2 : index
    %c0_4 = arith.constant 0 : index
    %c0_5 = arith.constant 0 : index
    %4 = vector.load %arg1[%c2, %c0_4, %c0_5] : memref<4x8x128xf32, #tpu.memory_space<vmem>>, vector<1x8x128xf32>
    %5 = vector.shape_cast %4 : vector<1x8x128xf32> to vector<8x128xf32>
    %c3 = arith.constant 3 : index
    %c0_6 = arith.constant 0 : index
    %c0_7 = arith.constant 0 : index
    %6 = vector.load %arg1[%c3, %c0_6, %c0_7] : memref<4x8x128xf32, #tpu.memory_space<vmem>>, vector<1x8x128xf32>
    %7 = vector.shape_cast %6 : vector<1x8x128xf32> to vector<8x128xf32>
    %c0_8 = arith.constant 0 : index
    %c0_9 = arith.constant 0 : index
    %c0_10 = arith.constant 0 : index
    %8 = vector.load %arg2[%c0_8, %c0_9, %c0_10] : memref<4x8x128xf32, #tpu.memory_space<vmem>>, vector<1x8x128xf32>
    %9 = vector.shape_cast %8 : vector<1x8x128xf32> to vector<8x128xf32>
    %c1_11 = arith.constant 1 : index
    %c0_12 = arith.constant 0 : index
    %c0_13 = arith.constant 0 : index
    %10 = vector.load %arg2[%c1_11, %c0_12, %c0_13] : memref<4x8x128xf32, #tpu.memory_space<vmem>>, vector<1x8x128xf32>
    %11 = vector.shape_cast %10 : vector<1x8x128xf32> to vector<8x128xf32>
    %c2_14 = arith.constant 2 : index
    %c0_15 = arith.constant 0 : index
    %c0_16 = arith.constant 0 : index
    %12 = vector.load %arg2[%c2_14, %c0_15, %c0_16] : memref<4x8x128xf32, #tpu.memory_space<vmem>>, vector<1x8x128xf32>
    %13 = vector.shape_cast %12 : vector<1x8x128xf32> to vector<8x128xf32>
    %c3_17 = arith.constant 3 : index
    %c0_18 = arith.constant 0 : index
    %c0_19 = arith.constant 0 : index
    %14 = vector.load %arg2[%c3_17, %c0_18, %c0_19] : memref<4x8x128xf32, #tpu.memory_space<vmem>>, vector<1x8x128xf32>
    %15 = vector.shape_cast %14 : vector<1x8x128xf32> to vector<8x128xf32>
    %cst = arith.constant 8.000000e-01 : f32
    %16 = vector.broadcast %cst : f32 to vector<8x128xf32>
    %17 = arith.mulf %13, %16 : vector<8x128xf32>
    %cst_20 = arith.constant 8.000000e-01 : f32
    %18 = vector.broadcast %cst_20 : f32 to vector<8x128xf32>
    %19 = arith.mulf %15, %18 : vector<8x128xf32>
    %20 = math.exp %17 : vector<8x128xf32>
    %21 = math.exp %19 : vector<8x128xf32>
    %22 = arith.subf %1, %9 : vector<8x128xf32>
    %23 = math.absf %22 : vector<8x128xf32>
    %cst_21 = arith.constant 5.000000e-01 : f32
    %24 = vector.broadcast %cst_21 : f32 to vector<8x128xf32>
    %25 = arith.mulf %23, %24 : vector<8x128xf32>
    %26 = arith.subf %3, %11 : vector<8x128xf32>
    %27 = math.absf %26 : vector<8x128xf32>
    %cst_22 = arith.constant 5.000000e-01 : f32
    %28 = vector.broadcast %cst_22 : f32 to vector<8x128xf32>
    %29 = arith.mulf %27, %28 : vector<8x128xf32>
    %30 = arith.addf %20, %25 : vector<8x128xf32>
    %31 = arith.addf %21, %29 : vector<8x128xf32>
    %32 = math.log %30 : vector<8x128xf32>
    %33 = arith.subf %32, %17 : vector<8x128xf32>
    %34 = arith.mulf %20, %33 : vector<8x128xf32>
    %c0_23 = arith.constant 0 : index
    %c0_24 = arith.constant 0 : index
    %c0_25 = arith.constant 0 : index
    %35 = vector.load %arg3[%c0_23, %c0_24, %c0_25] : memref<8x8x128xf32, #tpu.memory_space<vmem>>, vector<1x8x128xf32>
    %36 = vector.shape_cast %35 : vector<1x8x128xf32> to vector<8x128xf32>
    %37 = vector.shape_cast %34 : vector<8x128xf32> to vector<1x8x128xf32>
    tpu.vector_store %arg3[%c0_23, %c0_24, %c0_25], %37 {strides = array<i32>} : memref<8x8x128xf32, #tpu.memory_space<vmem>>, vector<1x8x128xf32>,
    %38 = math.log %31 : vector<8x128xf32>
    %39 = arith.subf %38, %19 : vector<8x128xf32>
    %40 = arith.mulf %21, %39 : vector<8x128xf32>
    %c1_26 = arith.constant 1 : index
    %c0_27 = arith.constant 0 : index
    %c0_28 = arith.constant 0 : index
    %41 = vector.load %arg3[%c1_26, %c0_27, %c0_28] : memref<8x8x128xf32, #tpu.memory_space<vmem>>, vector<1x8x128xf32>
    %42 = vector.shape_cast %41 : vector<1x8x128xf32> to vector<8x128xf32>
    %43 = vector.shape_cast %40 : vector<8x128xf32> to vector<1x8x128xf32>
    tpu.vector_store %arg3[%c1_26, %c0_27, %c0_28], %43 {strides = array<i32>} : memref<8x8x128xf32, #tpu.memory_space<vmem>>, vector<1x8x128xf32>,
    %44 = arith.divf %20, %30 : vector<8x128xf32>
    %c4 = arith.constant 4 : index
    %c0_29 = arith.constant 0 : index
    %c0_30 = arith.constant 0 : index
    %45 = vector.load %arg3[%c4, %c0_29, %c0_30] : memref<8x8x128xf32, #tpu.memory_space<vmem>>, vector<1x8x128xf32>
    %46 = vector.shape_cast %45 : vector<1x8x128xf32> to vector<8x128xf32>
    %47 = vector.shape_cast %44 : vector<8x128xf32> to vector<1x8x128xf32>
    tpu.vector_store %arg3[%c4, %c0_29, %c0_30], %47 {strides = array<i32>} : memref<8x8x128xf32, #tpu.memory_space<vmem>>, vector<1x8x128xf32>,
    %48 = arith.divf %21, %31 : vector<8x128xf32>
    %c5 = arith.constant 5 : index
    %c0_31 = arith.constant 0 : index
    %c0_32 = arith.constant 0 : index
    %49 = vector.load %arg3[%c5, %c0_31, %c0_32] : memref<8x8x128xf32, #tpu.memory_space<vmem>>, vector<1x8x128xf32>
    %50 = vector.shape_cast %49 : vector<1x8x128xf32> to vector<8x128xf32>
    %51 = vector.shape_cast %48 : vector<8x128xf32> to vector<1x8x128xf32>
    tpu.vector_store %arg3[%c5, %c0_31, %c0_32], %51 {strides = array<i32>} : memref<8x8x128xf32, #tpu.memory_space<vmem>>, vector<1x8x128xf32>,
    %52 = arith.subf %5, %13 : vector<8x128xf32>
    %53 = math.absf %52 : vector<8x128xf32>
    %cst_33 = arith.constant 8.000000e-01 : f32
    %54 = vector.broadcast %cst_33 : f32 to vector<8x128xf32>
    %55 = arith.mulf %53, %54 : vector<8x128xf32>
    %56 = arith.subf %7, %15 : vector<8x128xf32>
    %57 = math.absf %56 : vector<8x128xf32>
    %cst_34 = arith.constant 8.000000e-01 : f32
    %58 = vector.broadcast %cst_34 : f32 to vector<8x128xf32>
    %59 = arith.mulf %57, %58 : vector<8x128xf32>
    %cst_35 = arith.constant 0.000000e+00 : f32
    %60 = vector.broadcast %cst_35 : f32 to vector<8x128xf32>
    %61 = arith.subf %60, %55 : vector<8x128xf32>
    %62 = math.exp %61 : vector<8x128xf32>
    %cst_36 = arith.constant 0.000000e+00 : f32
    %63 = vector.broadcast %cst_36 : f32 to vector<8x128xf32>
    %64 = arith.subf %63, %59 : vector<8x128xf32>
    %65 = math.exp %64 : vector<8x128xf32>
    %66 = arith.addf %55, %62 : vector<8x128xf32>
    %cst_37 = arith.constant 1.000000e+00 : f32
    %67 = vector.broadcast %cst_37 : f32 to vector<8x128xf32>
    %68 = arith.subf %66, %67 : vector<8x128xf32>
    %cst_38 = arith.constant 1.250000e+00 : f32
    %69 = vector.broadcast %cst_38 : f32 to vector<8x128xf32>
    %70 = arith.mulf %68, %69 : vector<8x128xf32>
    %c2_39 = arith.constant 2 : index
    %c0_40 = arith.constant 0 : index
    %c0_41 = arith.constant 0 : index
    %71 = vector.load %arg3[%c2_39, %c0_40, %c0_41] : memref<8x8x128xf32, #tpu.memory_space<vmem>>, vector<1x8x128xf32>
    %72 = vector.shape_cast %71 : vector<1x8x128xf32> to vector<8x128xf32>
    %73 = vector.shape_cast %70 : vector<8x128xf32> to vector<1x8x128xf32>
    tpu.vector_store %arg3[%c2_39, %c0_40, %c0_41], %73 {strides = array<i32>} : memref<8x8x128xf32, #tpu.memory_space<vmem>>, vector<1x8x128xf32>,
    %74 = arith.addf %59, %65 : vector<8x128xf32>
    %cst_42 = arith.constant 1.000000e+00 : f32
    %75 = vector.broadcast %cst_42 : f32 to vector<8x128xf32>
    %76 = arith.subf %74, %75 : vector<8x128xf32>
    %cst_43 = arith.constant 1.250000e+00 : f32
    %77 = vector.broadcast %cst_43 : f32 to vector<8x128xf32>
    %78 = arith.mulf %76, %77 : vector<8x128xf32>
    %c3_44 = arith.constant 3 : index
    %c0_45 = arith.constant 0 : index
    %c0_46 = arith.constant 0 : index
    %79 = vector.load %arg3[%c3_44, %c0_45, %c0_46] : memref<8x8x128xf32, #tpu.memory_space<vmem>>, vector<1x8x128xf32>
    %80 = vector.shape_cast %79 : vector<1x8x128xf32> to vector<8x128xf32>
    %81 = vector.shape_cast %78 : vector<8x128xf32> to vector<1x8x128xf32>
    tpu.vector_store %arg3[%c3_44, %c0_45, %c0_46], %81 {strides = array<i32>} : memref<8x8x128xf32, #tpu.memory_space<vmem>>, vector<1x8x128xf32>,
    %cst_47 = arith.constant 1.000000e+00 : f32
    %82 = vector.broadcast %cst_47 : f32 to vector<8x128xf32>
    %83 = arith.subf %82, %62 : vector<8x128xf32>
    %c6 = arith.constant 6 : index
    %c0_48 = arith.constant 0 : index
    %c0_49 = arith.constant 0 : index
    %84 = vector.load %arg3[%c6, %c0_48, %c0_49] : memref<8x8x128xf32, #tpu.memory_space<vmem>>, vector<1x8x128xf32>
    %85 = vector.shape_cast %84 : vector<1x8x128xf32> to vector<8x128xf32>
    %86 = vector.shape_cast %83 : vector<8x128xf32> to vector<1x8x128xf32>
    tpu.vector_store %arg3[%c6, %c0_48, %c0_49], %86 {strides = array<i32>} : memref<8x8x128xf32, #tpu.memory_space<vmem>>, vector<1x8x128xf32>,
    %cst_50 = arith.constant 1.000000e+00 : f32
    %87 = vector.broadcast %cst_50 : f32 to vector<8x128xf32>
    %88 = arith.subf %87, %65 : vector<8x128xf32>
    %c7 = arith.constant 7 : index
    %c0_51 = arith.constant 0 : index
    %c0_52 = arith.constant 0 : index
    %89 = vector.load %arg3[%c7, %c0_51, %c0_52] : memref<8x8x128xf32, #tpu.memory_space<vmem>>, vector<1x8x128xf32>
    %90 = vector.shape_cast %89 : vector<1x8x128xf32> to vector<8x128xf32>
    %91 = vector.shape_cast %88 : vector<8x128xf32> to vector<1x8x128xf32>
    tpu.vector_store %arg3[%c7, %c0_51, %c0_52], %91 {strides = array<i32>} : memref<8x8x128xf32, #tpu.memory_space<vmem>>, vector<1x8x128xf32>,
    return
  }
  func.func @transform_0(%arg0: i32) -> (i32, i32, i32) {
    %c0_i32 = arith.constant 0 : i32
    %c0_i32_0 = arith.constant 0 : i32
    %c0_i32_1 = arith.constant 0 : i32
    return %c0_i32, %arg0, %c0_i32_0 : i32, i32, i32
  }
  func.func @transform_1(%arg0: i32) -> (i32, i32, i32) {
    %c0_i32 = arith.constant 0 : i32
    %c0_i32_0 = arith.constant 0 : i32
    %c0_i32_1 = arith.constant 0 : i32
    return %c0_i32, %arg0, %c0_i32_0 : i32, i32, i32
  }
  func.func @transform_2(%arg0: i32) -> (i32, i32, i32) {
    %c0_i32 = arith.constant 0 : i32
    %c0_i32_0 = arith.constant 0 : i32
    %c0_i32_1 = arith.constant 0 : i32
    return %c0_i32, %arg0, %c0_i32_0 : i32, i32, i32
  }
}

</mosaic_0001>

<llo_original>
// kernel: tpu_custom_call.1
$region0: #{tpu_custom_call.1}
  #allocation0 [shape = 'u32[]', space=smem, size = 0x4, offset = 0x4, fixed_abs, tag = 'smem constant byte address 0x4 - core index']
  #allocation1 [shape = 'u32[72,128]{1,0:T(1,128)}', space=vmem, size = 0x9000, scoped, tag = 'internal scratch']
  %s0 = inlined_call_operand.hbm [shape: f32[4,8,128], index: 0, kind: input, shape index: {}]
  %s1 = inlined_call_operand.hbm [shape: f32[4,8,128], index: 1, kind: input, shape index: {}]
  %s2 = inlined_call_operand.hbm [shape: f32[8,8,128], index: 2, kind: output, shape index: {}]
  %s3 = sld [smem:[#allocation0]]
  $region26: #{tpu_custom_call.1} parent=0
    _
  %s5 = ssub.s32 1, %s3
  %s6 = scalar_select 0, %s5, %s3
  $region1: #{tpu_custom_call.1} parent=0
    #allocation2 [shape = 'u8[16384]{0}', space=vmem, size = 0x4000, scoped, tag = 'input window, operand 0, single buffered']
    #allocation3 [shape = 's32[1]{0}', space=sflag, size = 0x4, scoped, tag = 'scoped memory for tpu_custom_call.1']
    #allocation4 [shape = 's32[1]{0}', space=sflag, size = 0x4, scoped, tag = 'scoped memory for tpu_custom_call.1']
    #allocation5 [shape = 'u8[16384]{0}', space=vmem, size = 0x4000, scoped, tag = 'input window, operand 1, single buffered']
    #allocation6 [shape = 's32[1]{0}', space=sflag, size = 0x4, scoped, tag = 'scoped memory for tpu_custom_call.1']
    #allocation7 [shape = 'u8[32768]{0}', space=vmem, size = 0x8000, scoped, tag = 'output window, operand 0, single buffered']
    %7 = vsyncpa [#allocation3], 0
    %8 = vsyncpa [#allocation6], 0
    %9 = vsyncpa [#allocation4], 0
    // Predicated region
    $region2: #{tpu_custom_call.1} parent=1 // pred_check
      _
    $region3: #{tpu_custom_call.1} parent=1 // pred_check_branch
      %11 = sbr.rel (0) target = $region5
    $region4: #{tpu_custom_call.1} parent=1 // pred_region
      %13 = vsyncadd [#allocation3], 0
      %s14 = sshll.u32 %s0, 4
      %s15 = int_to_ptr.hbm [resolvable:$true] %s14
      %s16 = sshll.u32 [#allocation2], 4
      %s17 = int_to_ptr.vmem [resolvable:$true] %s16
      %22 = dma.hbm_to_vmem [thread:$0]  %s15, 512, %s17, [#allocation3], 128, 128, 8
    $region5: #{tpu_custom_call.1} parent=1 // pred_fallthru
      _
    // Predicated region
    $region6: #{tpu_custom_call.1} parent=1 // pred_check
      _
    $region7: #{tpu_custom_call.1} parent=1 // pred_check_branch
      %24 = sbr.rel (0) target = $region9
    $region8: #{tpu_custom_call.1} parent=1 // pred_region
      %26 = vsyncadd [#allocation6], 0
      %s27 = sshll.u32 %s1, 4
      %s28 = int_to_ptr.hbm [resolvable:$true] %s27
      %s29 = sshll.u32 [#allocation5], 4
      %s30 = int_to_ptr.vmem [resolvable:$true] %s29
      %35 = dma.hbm_to_vmem [thread:$0]  %s28, 512, %s30, [#allocation6], 128, 128, 8
    $region9: #{tpu_custom_call.1} parent=1 // pred_fallthru
      _
    // Predicated region
    $region10: #{tpu_custom_call.1} parent=1 // pred_check
      _
    $region11: #{tpu_custom_call.1} parent=1 // pred_check_branch
      %37 = sbr.rel (0) target = $region13
    $region12: #{tpu_custom_call.1} parent=1 // pred_region
      %39 = dma.done [#allocation3], 512
    $region13: #{tpu_custom_call.1} parent=1 // pred_fallthru
      _
    // Predicated region
    $region14: #{tpu_custom_call.1} parent=1 // pred_check
      _
    $region15: #{tpu_custom_call.1} parent=1 // pred_check_branch
      %41 = sbr.rel (0) target = $region17
    $region16: #{tpu_custom_call.1} parent=1 // pred_region
      %43 = dma.done [#allocation6], 512
    $region17: #{tpu_custom_call.1} parent=1 // pred_fallthru
      _
    %v44 = vld [vmem:[#allocation2] sm:$0xff]
    %s45 = scalar_lea.vmem [#allocation2], 8
    %v46 = vld [vmem:[%s45] sm:$0xff]
    %s47 = scalar_lea.vmem [#allocation2], 16
    %v48 = vld [vmem:[%s47] sm:$0xff]
    %s49 = scalar_lea.vmem [#allocation2], 24
    %v50 = vld [vmem:[%s49] sm:$0xff]
    %v51 = vld [vmem:[#allocation5] sm:$0xff]
    %s52 = scalar_lea.vmem [#allocation5], 8
    %v53 = vld [vmem:[%s52] sm:$0xff]
    %s54 = scalar_lea.vmem [#allocation5], 16
    %v55 = vld [vmem:[%s54] sm:$0xff]
    %s56 = scalar_lea.vmem [#allocation5], 24
    %v57 = vld [vmem:[%s56] sm:$0xff]
    %v58 = vmul.f32 %v55, 0.8
    %v59 = vmul.f32 %v57, 0.8
    %v60 = vmul.f32 %v58, 1.442695
    %v61 = vpow.pop %v60
    %v62 = vmul.f32 %v59, 1.442695
    %v63 = vpow.pop %v62
    %v64 = vsub.f32 %v44, %v51
    %v65 = vand.u32 2147483647, %v64
    %v66 = vmul.f32 %v65, 0.5
    %v67 = vsub.f32 %v46, %v53
    %v68 = vand.u32 2147483647, %v67
    %v69 = vmul.f32 %v68, 0.5
    %v70 = vadd.f32 %v61, %v66
    %v71 = vadd.f32 %v63, %v69
    %v72 = vlog2.pop %v70
    %v73 = vmul.f32 %v72, 0.6931472
    %v74 = vsub.f32 %v73, %v58
    %v75 = vmul.f32 %v61, %v74
    %76 = vst [vmem:[#allocation7] sm:$0xff] %v75
    %v77 = vlog2.pop %v71
    %v78 = vmul.f32 %v77, 0.6931472
    %v79 = vsub.f32 %v78, %v59
    %v80 = vmul.f32 %v63, %v79
    %s81 = scalar_lea.vmem [#allocation7], 8
    %82 = vst [vmem:[%s81] sm:$0xff] %v80
    %v83 = vrcp.pop %v70
    %v84 = vmul.f32 %v70, %v83
    %v85 = vsub.f32 1.0, %v84
    %v86 = vmul.f32 %v83, %v85
    %v87 = vadd.f32 %v83, %v86
    %vm88 = vweird.f32 %v70
    %vm89 = vweird.f32 %v83
    %vm90 = vmor %vm88, %vm89
    %v91 = vsel %vm90, %v83, %v87
    %v92 = vand.u32 2147483647, %v70
    %vm93 = vcmp.eq.f32.partialorder %v92, 8.507059e+37
    %v94 = vand.u32 %v70, 2147483648
    %v95 = vor.u32 1.1754944e-38, %v94
    %v96 = vsel %vm93, %v95, %v91
    %v97 = vmul.f32 %v61, %v96
    %s98 = scalar_lea.vmem [#allocation7], 32
    %99 = vst [vmem:[%s98] sm:$0xff] %v97
    %v100 = vrcp.pop %v71
    %v101 = vmul.f32 %v71, %v100
    %v102 = vsub.f32 1.0, %v101
    %v103 = vmul.f32 %v100, %v102
    %v104 = vadd.f32 %v100, %v103
    %vm105 = vweird.f32 %v71
    %vm106 = vweird.f32 %v100
    %vm107 = vmor %vm105, %vm106
    %v108 = vsel %vm107, %v100, %v104
    %v109 = vand.u32 2147483647, %v71
    %vm110 = vcmp.eq.f32.partialorder %v109, 8.507059e+37
    %v111 = vand.u32 %v71, 2147483648
    %v112 = vor.u32 1.1754944e-38, %v111
    %v113 = vsel %vm110, %v112, %v108
    %v114 = vmul.f32 %v63, %v113
    %s115 = scalar_lea.vmem [#allocation7], 40
    %116 = vst [vmem:[%s115] sm:$0xff] %v114
    %v117 = vsub.f32 %v48, %v55
    %v118 = vand.u32 2147483647, %v117
    %v119 = vmul.f32 %v118, 0.8
    %v120 = vsub.f32 %v50, %v57
    %v121 = vand.u32 2147483647, %v120
    %v122 = vmul.f32 %v121, 0.8
    %v123 = vsub.f32 0.0, %v119
    %v124 = vmul.f32 %v123, 1.442695
    %v125 = vpow.pop %v124
    %v126 = vsub.f32 0.0, %v122
    %v127 = vmul.f32 %v126, 1.442695
    %v128 = vpow.pop %v127
    %v129 = vadd.f32 %v119, %v125
    %v130 = vsub.f32 %v129, 1.0
    %v131 = vmul.f32 %v130, 1.25
    %s132 = scalar_lea.vmem [#allocation7], 16
    %133 = vst [vmem:[%s132] sm:$0xff] %v131
    %v134 = vadd.f32 %v122, %v128
    %v135 = vsub.f32 %v134, 1.0
    %v136 = vmul.f32 %v135, 1.25
    %s137 = scalar_lea.vmem [#allocation7], 24
    %138 = vst [vmem:[%s137] sm:$0xff] %v136
    %v139 = vsub.f32 1.0, %v125
    %s140 = scalar_lea.vmem [#allocation7], 48
    %141 = vst [vmem:[%s140] sm:$0xff] %v139
    %v142 = vsub.f32 1.0, %v128
    %s143 = scalar_lea.vmem [#allocation7], 56
    %144 = vst [vmem:[%s143] sm:$0xff] %v142
    // Predicated region
    $region18: #{tpu_custom_call.1} parent=1 // pred_check
      _
    $region19: #{tpu_custom_call.1} parent=1 // pred_check_branch
      %146 = sbr.rel (0) target = $region21
    $region20: #{tpu_custom_call.1} parent=1 // pred_region
      %148 = vsyncadd [#allocation4], 0
      %s149 = sshll.u32 [#allocation7], 4
      %s150 = int_to_ptr.vmem [resolvable:$true] %s149
      %s151 = sshll.u32 %s2, 4
      %s152 = int_to_ptr.hbm [resolvable:$true] %s151
      %157 = dma.vmem_to_hbm [thread:$0]  %s150, 1024, %s152, [#allocation4], 128, 128, 8
    $region21: #{tpu_custom_call.1} parent=1 // pred_fallthru
      _
    // Predicated region
    $region22: #{tpu_custom_call.1} parent=1 // pred_check
      _
    $region23: #{tpu_custom_call.1} parent=1 // pred_check_branch
      %159 = sbr.rel (0) target = $region25
    $region24: #{tpu_custom_call.1} parent=1 // pred_region
      %161 = dma.done [#allocation4], 1024
    $region25: #{tpu_custom_call.1} parent=1 // pred_fallthru
      _
    %162 = vsyncpa [#allocation3], 1
    %163 = vsyncpa [#allocation6], 1
    %164 = vsyncpa [#allocation4], 1

</llo_original>
